<compile_context>
chip_gen: v5e
topology: v5e:2x2
jax: 0.10.0
libtpu: 0.0.40
codegen_flags: <defaults>
</compile_context>

<pallas_src>
import functools

import jax
import jax.numpy as jnp
from jax.experimental import pallas as pl
from jax.experimental.pallas import tpu as pltpu

_LANES = 128
_MAX_TILE_ROWS = 8192                 # caps per-step f32 intermediates (~4 MiB each)
_VMEM_LIMIT_BYTES = 32 * 1024 * 1024  # fits v5e/v6e/v7x; above v5e's 16 MiB default


def _round_down(x, m):
    return (x // m) * m


def _sublane(dtype):
    # Sub-32-bit dtypes pack along sublanes: f32 -> 8, bf16/f16 -> 16, 8-bit -> 32.
    return {4: 8, 2: 16, 1: 32}.get(jnp.dtype(dtype).itemsize, 8)


def _rmse_partial_kernel(rows, tile_rows, acc_rows, ragged, p_ref, t_ref, o_ref):
    """Accumulate per-lane partial sums of (p - t)^2 into an (acc_rows, 128) block.

    Grid is (num_steps,); the single output block is resident across the
    "arbitrary" reduction axis and acts as the accumulator.
    """
    i = pl.program_id(0)

    @pl.when(i == 0)
    def _init():
        o_ref[...] = jnp.zeros_like(o_ref)

    def accumulate(masked):
        # Upcast in-kernel (mandatory on v5e; avoids an extra un-hidden HBM pass).
        d = p_ref[...].astype(jnp.float32) - t_ref[...].astype(jnp.float32)
        sq = d * d
        if masked:
            # Boundary block extends past the data; its OOB region is undefined
            # (possibly NaN/Inf), so mask with a SELECT applied to sq — never a
            # multiplicative mask and never on the inputs.
            row_ids = i * tile_rows + jax.lax.broadcasted_iota(
                jnp.int32, (tile_rows, _LANES), 0)
            sq = jnp.where(row_ids < rows, sq, 0.0)

        # Fold (tile_rows, 128) -> (acc_rows, 128): acc_rows/8 independent vreg
        # accumulation chains on the VPU (no per-step XLU cross-lane reduce).
        full = (tile_rows // acc_rows) * acc_rows
        rem = tile_rows - full
        if full:
            body = sq if rem == 0 else sq[:full]
            o_ref[...] += jnp.sum(
                body.reshape(full // acc_rows, acc_rows, _LANES), axis=0)
        if rem:
            # Only hit for a tiny single-step full-extent tile whose row count
            # is not a multiple of 8: one-off cross-sublane reduce of <8 rows
            # (plus the folded part above).
            o_ref[0:1, :] += jnp.sum(sq[full:], axis=0, keepdims=True)

    if ragged:
        last = pl.num_programs(0) - 1

        @pl.when(i < last)
        def _interior():
            accumulate(masked=False)

        @pl.when(i == last)
        def _boundary():
            accumulate(masked=True)
    else:
        accumulate(masked=False)


def rmse_loss(predicted, target, *, tile_budget_bytes=2 * 1024 * 1024):
    """Pallas equivalent of torch.sqrt(nn.MSELoss()(predicted, target))."""
    assert predicted.shape == target.shape, (
        "shapes must match (no broadcasting in MSELoss default)")
    n = predicted.size
    assert n > 0, "MSELoss of an empty tensor is undefined"

    flat_p = predicted.reshape(-1)
    flat_t = target.reshape(-1)

    rows = n // _LANES
    n_main = rows * _LANES
    tail = n - n_main          # <= 127 elements, handled outside the kernel

    total = None
    if rows > 0:
        p2 = flat_p[:n_main].reshape(rows, _LANES)
        t2 = flat_t[:n_main].reshape(rows, _LANES)

        sub = max(_sublane(p2.dtype), _sublane(t2.dtype))
        itemsize = max(p2.dtype.itemsize, t2.dtype.itemsize)

        # Byte-based tile sizing: ~tile_budget_bytes of input bytes per buffer,
        # capped so the full-tile f32 intermediates stay small; rounded to the
        # dtype sublane multiple.  A single-step full-extent block is used when
        # the whole slab fits.
        cap = tile_budget_bytes // (_LANES * itemsize)
        cap = min(cap, _MAX_TILE_ROWS)
        cap = max(sub, _round_down(cap, sub))
        tile_rows = rows if rows <= cap else cap

        num_steps = pl.cdiv(rows, tile_rows)
        ragged = (rows % tile_rows) != 0   # only the last step is masked

        # Widest fold group (more independent accumulation chains) that divides
        # the tile; falls back to 8 for tiny full-extent tiles.
        if tile_rows % 8 == 0:
            acc_rows = max(g for g in (8, 16, 32, 64) if tile_rows % g == 0)
        else:
            acc_rows = 8

        in_spec = pl.BlockSpec((tile_rows, _LANES), lambda i: (i, 0))
        bytes_in = n_main * (p2.dtype.itemsize + t2.dtype.itemsize)

        partial_sums = pl.pallas_call(
            functools.partial(
                _rmse_partial_kernel, rows, tile_rows, acc_rows, ragged),
            out_shape=jax.ShapeDtypeStruct((acc_rows, _LANES), jnp.float32),
            grid_spec=pltpu.PrefetchScalarGridSpec(
                num_scalar_prefetch=0,
                grid=(num_steps,),
                in_specs=[in_spec, in_spec],
                out_specs=pl.BlockSpec((acc_rows, _LANES), lambda i: (0, 0)),
            ),
            compiler_params=pltpu.CompilerParams(
                dimension_semantics=("arbitrary",),
                vmem_limit_bytes=_VMEM_LIMIT_BYTES,
            ),
            cost_estimate=pl.CostEstimate(
                flops=3 * n_main,
                transcendentals=0,
                bytes_accessed=bytes_in + acc_rows * _LANES * 4,
            ),
        )(p2, t2)

        # Single cheap cross-lane reduce on the tiny partial-sum slab.
        total = jnp.sum(partial_sums)

    if tail:
        # <=127-element ragged tail: tiny fused reduction, no full-array pad copy.
        tp = flat_p[n_main:].astype(jnp.float32)
        tt = flat_t[n_main:].astype(jnp.float32)
        dt = tp - tt
        tail_sum = jnp.sum(dt * dt)
        total = tail_sum if total is None else total + tail_sum

    return jnp.sqrt(total / jnp.float32(n))


if __name__ == "__main__":
    key = jax.random.PRNGKey(0)

    test_cases = [
        # (shape, dtype, rmse_loss kwargs)
        ((2, 4, 16, 16), jnp.float32, {}),                  # single step, exact rows
        ((8, 16, 48, 48), jnp.float32, {}),                 # single big full-extent tile
        ((8, 16, 48, 48), jnp.float32,
         {"tile_budget_bytes": 160 * 1024}),                # multi-step + ragged last tile
        ((4, 8, 32, 48), jnp.bfloat16, {}),                 # bf16 (16-row sublane packing)
        ((3, 5, 7, 11), jnp.float32, {}),                   # rows % 8 != 0 + tail path
        ((7, 11, 13, 5), jnp.float32,
         {"tile_budget_bytes": 8 * 1024}),                  # multi-step + ragged + tail
    ]

    for shape, dtype, kwargs in test_cases:
        key, kp, kt = jax.random.split(key, 3)
        predicted = jax.random.normal(kp, shape, dtype=jnp.float32).astype(dtype)
        target = jax.random.normal(kt, shape, dtype=jnp.float32).astype(dtype)

        loss = jax.block_until_ready(rmse_loss(predicted, target, **kwargs))

        pf = predicted.astype(jnp.float32)
        tf = target.astype(jnp.float32)
        ref = jnp.sqrt(jnp.mean((pf - tf) ** 2))
        assert jnp.allclose(loss, ref, rtol=1e-4, atol=1e-6), (shape, dtype, loss, ref)

    print("KERNEL_OK")
</pallas_src>

<mosaic_0001>
module attributes {stable_mosaic.version = 11 : i64} {
  func.func @_rmse_partial_kernel(%arg0: i32, %arg1: memref<16x128xf32, #tpu.memory_space<vmem>>, %arg2: memref<16x128xf32, #tpu.memory_space<vmem>>, %arg3: memref<16x128xf32, #tpu.memory_space<vmem>>) attributes {dimension_semantics = [#tpu.dimension_semantics<arbitrary>], iteration_bounds = array<i64: 1>, scalar_prefetch = 0 : i64, scratch_operands = 0 : i64, tpu.core_type = #tpu.core_type<tc>, window_params = [{transform_indices = @transform_0, window_bounds = array<i64: 16, 128>}, {transform_indices = @transform_1, window_bounds = array<i64: 16, 128>}, {pipeline_mode = #tpu.pipeline_mode<synchronous>, transform_indices = @transform_2, window_bounds = array<i64: 16, 128>}]} {
    %c0_i32 = arith.constant 0 : i32
    %0 = arith.cmpi eq, %arg0, %c0_i32 : i32
    %1 = arith.extui %0 : i1 to i32
    %c0_i32_0 = arith.constant 0 : i32
    %2 = arith.cmpi ne, %1, %c0_i32_0 : i32
    scf.if %2 {
      %cst_8 = arith.constant 0.000000e+00 : f32
      %12 = vector.broadcast %cst_8 : f32 to vector<16x128xf32>
      %c0_9 = arith.constant 0 : index
      %c0_10 = arith.constant 0 : index
      %13 = vector.load %arg3[%c0_9, %c0_10] : memref<16x128xf32, #tpu.memory_space<vmem>>, vector<16x128xf32>
      tpu.vector_store %arg3[%c0_9, %c0_10], %12 {strides = array<i32>} : memref<16x128xf32, #tpu.memory_space<vmem>>, vector<16x128xf32>,
    } else {
    }
    %c0 = arith.constant 0 : index
    %c0_1 = arith.constant 0 : index
    %3 = vector.load %arg1[%c0, %c0_1] : memref<16x128xf32, #tpu.memory_space<vmem>>, vector<16x128xf32>
    %c0_2 = arith.constant 0 : index
    %c0_3 = arith.constant 0 : index
    %4 = vector.load %arg2[%c0_2, %c0_3] : memref<16x128xf32, #tpu.memory_space<vmem>>, vector<16x128xf32>
    %5 = arith.subf %3, %4 : vector<16x128xf32>
    %6 = arith.mulf %5, %5 : vector<16x128xf32>
    %c0_4 = arith.constant 0 : index
    %c0_5 = arith.constant 0 : index
    %7 = vector.load %arg3[%c0_4, %c0_5] : memref<16x128xf32, #tpu.memory_space<vmem>>, vector<16x128xf32>
    %8 = vector.shape_cast %6 : vector<16x128xf32> to vector<1x16x128xf32>
    %cst = arith.constant dense<0.000000e+00> : vector<16x128xf32>
    %9 = vector.multi_reduction <add>, %8, %cst [0] : vector<1x16x128xf32> to vector<16x128xf32>
    %10 = arith.addf %7, %9 : vector<16x128xf32>
    %c0_6 = arith.constant 0 : index
    %c0_7 = arith.constant 0 : index
    %11 = vector.load %arg3[%c0_6, %c0_7] : memref<16x128xf32, #tpu.memory_space<vmem>>, vector<16x128xf32>
    tpu.vector_store %arg3[%c0_6, %c0_7], %10 {strides = array<i32>} : memref<16x128xf32, #tpu.memory_space<vmem>>, vector<16x128xf32>,
    return
  }
  func.func @transform_0(%arg0: i32) -> (i32, i32) {
    %c0_i32 = arith.constant 0 : i32
    %c0_i32_0 = arith.constant 0 : i32
    return %arg0, %c0_i32 : i32, i32
  }
  func.func @transform_1(%arg0: i32) -> (i32, i32) {
    %c0_i32 = arith.constant 0 : i32
    %c0_i32_0 = arith.constant 0 : i32
    return %arg0, %c0_i32 : i32, i32
  }
  func.func @transform_2(%arg0: i32) -> (i32, i32) {
    %c0_i32 = arith.constant 0 : i32
    %c0_i32_0 = arith.constant 0 : i32
    %c0_i32_1 = arith.constant 0 : i32
    return %c0_i32, %c0_i32_0 : i32, i32
  }
}

</mosaic_0001>

<llo_original>
// kernel: tpu_custom_call.1
$region0: #{tpu_custom_call.1}
  #allocation0 [shape = 'u32[]', space=smem, size = 0x4, offset = 0x4, fixed_abs, tag = 'smem constant byte address 0x4 - core index']
  #allocation1 [shape = 'u32[72,128]{1,0:T(1,128)}', space=vmem, size = 0x9000, scoped, tag = 'internal scratch']
  %s0 = inlined_call_operand.hbm [shape: f32[16,128], index: 0, kind: input, shape index: {}]
  %s1 = inlined_call_operand.hbm [shape: f32[16,128], index: 1, kind: input, shape index: {}]
  %s2 = inlined_call_operand.hbm [shape: f32[16,128], index: 2, kind: output, shape index: {}]
  %s3 = sld [smem:[#allocation0]]
  $region30: #{tpu_custom_call.1} parent=0
    _
  %s5 = ssub.s32 1, %s3
  %s6 = scalar_select 0, %s5, %s3
  $region1: #{tpu_custom_call.1} parent=0
    #allocation2 [shape = 'u8[8192]{0}', space=vmem, size = 0x2000, scoped, tag = 'input window, operand 0, single buffered']
    #allocation3 [shape = 's32[1]{0}', space=sflag, size = 0x4, scoped, tag = 'scoped memory for tpu_custom_call.1']
    #allocation4 [shape = 's32[1]{0}', space=sflag, size = 0x4, scoped, tag = 'scoped memory for tpu_custom_call.1']
    #allocation5 [shape = 'u8[8192]{0}', space=vmem, size = 0x2000, scoped, tag = 'input window, operand 1, single buffered']
    #allocation6 [shape = 's32[1]{0}', space=sflag, size = 0x4, scoped, tag = 'scoped memory for tpu_custom_call.1']
    #allocation7 [shape = 'u8[8192]{0}', space=vmem, size = 0x2000, scoped, tag = 'output window, operand 0, single buffered']
    %7 = vsyncpa [#allocation3], 0
    %8 = vsyncpa [#allocation6], 0
    %9 = vsyncpa [#allocation4], 0
    // Predicated region
    $region2: #{tpu_custom_call.1} parent=1 // pred_check
      _
    $region3: #{tpu_custom_call.1} parent=1 // pred_check_branch
      %11 = sbr.rel (0) target = $region5
    $region4: #{tpu_custom_call.1} parent=1 // pred_region
      %13 = vsyncadd [#allocation3], 0
      %s14 = sshll.u32 %s0, 4
      %s15 = int_to_ptr.hbm [resolvable:$true] %s14
      %s16 = sshll.u32 [#allocation2], 4
      %s17 = int_to_ptr.vmem [resolvable:$true] %s16
      %22 = dma.hbm_to_vmem [thread:$0]  %s15, 256, %s17, [#allocation3], 128, 128, 8
    $region5: #{tpu_custom_call.1} parent=1 // pred_fallthru
      _
    // Predicated region
    $region6: #{tpu_custom_call.1} parent=1 // pred_check
      _
    $region7: #{tpu_custom_call.1} parent=1 // pred_check_branch
      %24 = sbr.rel (0) target = $region9
    $region8: #{tpu_custom_call.1} parent=1 // pred_region
      %26 = vsyncadd [#allocation6], 0
      %s27 = sshll.u32 %s1, 4
      %s28 = int_to_ptr.hbm [resolvable:$true] %s27
      %s29 = sshll.u32 [#allocation5], 4
      %s30 = int_to_ptr.vmem [resolvable:$true] %s29
      %35 = dma.hbm_to_vmem [thread:$0]  %s28, 256, %s30, [#allocation6], 128, 128, 8
    $region9: #{tpu_custom_call.1} parent=1 // pred_fallthru
      _
    // Predicated region
    $region10: #{tpu_custom_call.1} parent=1 // pred_check
      _
    $region11: #{tpu_custom_call.1} parent=1 // pred_check_branch
      %37 = sbr.rel (0) target = $region13
    $region12: #{tpu_custom_call.1} parent=1 // pred_region
      %39 = dma.done [#allocation3], 256
    $region13: #{tpu_custom_call.1} parent=1 // pred_fallthru
      _
    // Predicated region
    $region14: #{tpu_custom_call.1} parent=1 // pred_check
      _
    $region15: #{tpu_custom_call.1} parent=1 // pred_check_branch
      %41 = sbr.rel (0) target = $region17
    $region16: #{tpu_custom_call.1} parent=1 // pred_region
      %43 = dma.done [#allocation6], 256
    $region17: #{tpu_custom_call.1} parent=1 // pred_fallthru
      _
    %p44 = scmp.eq.s32.totalorder 0, 0
    // Predicated region
    $region18: #{tpu_custom_call.1} parent=1 // pred_check
      %p45 = pneg %p44
    $region19: #{tpu_custom_call.1} parent=1 // pred_check_branch
      %47 = sbr.rel (%p45) target = $region21
    $region20: #{tpu_custom_call.1} parent=1 // pred_region
      %48 = vst [vmem:[#allocation7] sm:$0xff] 0.0
      %49 = vst [vmem:[#allocation7 + $0x8] sm:$0xff] 0.0
    $region21: #{tpu_custom_call.1} parent=1 // pred_fallthru
      _
    %v50 = vld [vmem:[#allocation2] sm:$0xff]
    %v51 = vld [vmem:[#allocation2 + $0x8] sm:$0xff]
    %v52 = vld [vmem:[#allocation5] sm:$0xff]
    %v53 = vld [vmem:[#allocation5 + $0x8] sm:$0xff]
    %v54 = vsub.f32 %v50, %v52
    %v55 = vsub.f32 %v51, %v53
    %v56 = vmul.f32 %v54, %v54
    %v57 = vmul.f32 %v55, %v55
    %v58 = vld [vmem:[#allocation7] sm:$0xff]
    %v59 = vld [vmem:[#allocation7 + $0x8] sm:$0xff]
    %v60 = vadd.f32 %v56, 0.0
    %v61 = vadd.f32 %v57, 0.0
    %v62 = vadd.f32 %v58, %v60
    %v63 = vadd.f32 %v59, %v61
    %64 = vst [vmem:[#allocation7] sm:$0xff] %v62
    %65 = vst [vmem:[#allocation7 + $0x8] sm:$0xff] %v63
    // Predicated region
    $region22: #{tpu_custom_call.1} parent=1 // pred_check
      _
    $region23: #{tpu_custom_call.1} parent=1 // pred_check_branch
      %67 = sbr.rel (0) target = $region25
    $region24: #{tpu_custom_call.1} parent=1 // pred_region
      %69 = vsyncadd [#allocation4], 0
      %s70 = sshll.u32 [#allocation7], 4
      %s71 = int_to_ptr.vmem [resolvable:$true] %s70
      %s72 = sshll.u32 %s2, 4
      %s73 = int_to_ptr.hbm [resolvable:$true] %s72
      %78 = dma.vmem_to_hbm [thread:$0]  %s71, 256, %s73, [#allocation4], 128, 128, 8
    $region25: #{tpu_custom_call.1} parent=1 // pred_fallthru
      _
    // Predicated region
    $region26: #{tpu_custom_call.1} parent=1 // pred_check
      _
    $region27: #{tpu_custom_call.1} parent=1 // pred_check_branch
      %80 = sbr.rel (0) target = $region29
    $region28: #{tpu_custom_call.1} parent=1 // pred_region
      %82 = dma.done [#allocation4], 256
    $region29: #{tpu_custom_call.1} parent=1 // pred_fallthru
      _
    %83 = vsyncpa [#allocation3], 1
    %84 = vsyncpa [#allocation6], 1
    %85 = vsyncpa [#allocation4], 1

</llo_original>
